<compile_context>
chip_gen: v6e
topology: v6e:2x2x1
jax: 0.10.0
libtpu: 0.0.40
codegen_flags: <defaults>
</compile_context>

<pallas_src>
import functools

import numpy as np

import jax
import jax.numpy as jnp
from jax.experimental import pallas as pl
from jax.experimental.pallas import tpu as pltpu


def _lambda_kernel(x_ref, s_ref, o_ref, *, nb, c_in, pad):
    """x_ref: (NB, C_in, H*W)   s_ref: (H*W, Ho*Wo)   o_ref: (NB, C_out, Ho*Wo)."""
    hw = x_ref.shape[-1]
    howo = o_ref.shape[-1]

    # Fold the batch block into the MXU M dimension.  This merge is free when
    # C_in is a multiple of 8 (sublane-aligned); otherwise NB == 1 and it is a
    # plain leading-dim squeeze.
    x2d = x_ref[...].reshape(nb * c_in, hw)
    sub = jnp.dot(x2d, s_ref[...], preferred_element_type=jnp.float32)
    sub = sub.astype(o_ref.dtype).reshape(nb, c_in, howo)

    if pad > 0:  # static Python condition
        # One unmasked full-block zero store, then one store of the selected
        # channels into the middle.  pad is a multiple of 8 for the real
        # ResNet stages (planes//4 = 8 or 16, f32), so the second store is
        # sublane-aligned there too; the pad channels cost no input DMA.
        o_ref[...] = jnp.zeros(o_ref.shape, dtype=o_ref.dtype)
        o_ref[:, pad:pad + c_in, :] = sub
    else:
        o_ref[...] = sub


@functools.lru_cache(maxsize=None)
def _selection_matrix(h, w, dtype_name):
    """One-hot (H*W, Ho*Wo) matrix implementing x[..., ::2, ::2].

    Built with numpy once per (h, w, dtype) and kept device-resident, so no
    iota/compare/cast XLA ops are re-emitted on every call."""
    ho, wo = (h + 1) // 2, (w + 1) // 2
    src = np.arange(h * w)
    dst = np.arange(ho * wo)
    sel = ((src[:, None] // w == 2 * (dst[None, :] // wo))
           & (src[:, None] % w == 2 * (dst[None, :] % wo)))
    return jnp.asarray(sel.astype(dtype_name))


def _pick_batch_block(b, c_in, hw, c_out, howo, itemsize):
    """Largest NB with B % NB == 0 such that (a) NB*C_in <= 512 MXU rows,
    (b) the double-buffered x/out tiles stay within a small VMEM budget, and
    (c) the 'parallel' grid keeps >= 2 steps when B >= 2 (v7x has 2 TCs)."""
    best = 1
    for nb in range(1, b + 1):
        if b % nb:
            continue
        if nb > 1 and c_in % 8:
            continue  # keep the in-kernel (NB, C_in) -> (NB*C_in) merge free
        if nb * c_in > 512:
            break
        step_bytes = 2 * nb * (c_in * hw + c_out * howo) * itemsize  # 2x: double buffer
        if step_bytes > (8 << 20):
            break
        if b >= 2 and b // nb < 2:
            continue
        best = nb
    return best


def lambda_layer(x, pad):
    """Pallas equivalent of F.pad(x[:, :, ::2, ::2], (0, 0, 0, 0, pad, pad))."""
    b, c_in, h, w = x.shape
    ho, wo = (h + 1) // 2, (w + 1) // 2   # matches x[:, :, ::2, ::2] for odd H/W too
    c_out = c_in + 2 * pad
    hw, howo = h * w, ho * wo

    orig_dtype = x.dtype
    if not jnp.issubdtype(orig_dtype, jnp.floating):
        x = x.astype(jnp.float32)  # MXU has no integer path on v7x; cast back below
    dtype = x.dtype
    itemsize = jnp.dtype(dtype).itemsize

    sel = _selection_matrix(h, w, jnp.dtype(dtype).name)
    x_flat = x.reshape(b, c_in, hw)   # lane-dense (H*W) last axis; free reshape

    nb = _pick_batch_block(b, c_in, hw, c_out, howo, itemsize)
    kernel = functools.partial(_lambda_kernel, nb=nb, c_in=c_in, pad=pad)

    cost = pl.CostEstimate(
        flops=2 * b * c_in * hw * howo,
        transcendentals=0,
        bytes_accessed=(b * c_in * hw + hw * howo + b * c_out * howo) * itemsize,
    )

    out = pl.pallas_call(
        kernel,
        out_shape=jax.ShapeDtypeStruct((b, c_out, howo), dtype),
        grid_spec=pltpu.PrefetchScalarGridSpec(
            num_scalar_prefetch=0,
            grid=(b // nb,),
            in_specs=[
                pl.BlockSpec((nb, c_in, hw), lambda i: (i, 0, 0)),
                # Constant, never-changing selection matrix: single-buffered
                # (default double-buffering would waste an extra copy of VMEM).
                pl.BlockSpec((hw, howo), lambda i: (0, 0),
                             pipeline_mode=pl.Buffered(1)),
            ],
            out_specs=pl.BlockSpec((nb, c_out, howo), lambda i: (i, 0, 0)),
        ),
        compiler_params=pltpu.CompilerParams(dimension_semantics=("parallel",)),
        cost_estimate=cost,
    )(x_flat, sel)

    out = out.reshape(b, c_out, ho, wo)
    return out if out.dtype == orig_dtype else out.astype(orig_dtype)


if __name__ == "__main__":
    key = jax.random.PRNGKey(0)
    B, C, H, W = 2, 4, 16, 16
    PAD = 2  # planes // 4 with planes = 8 -> output channels = C + 2*PAD = 8

    x = jax.random.normal(key, (B, C, H, W), dtype=jnp.float32)

    y = lambda_layer(x, PAD)
    y = jax.block_until_ready(y)

    # Pure-JAX reference of the same lambda (glue only, for verification).
    ref = jnp.pad(x[:, :, ::2, ::2], ((0, 0), (PAD, PAD), (0, 0), (0, 0)))
    assert y.shape == (B, C + 2 * PAD, H // 2, W // 2)
    assert jnp.allclose(y, ref, atol=1e-6), "mismatch vs reference"

    print("KERNEL_OK")
</pallas_src>

<mosaic_0001>
module attributes {stable_mosaic.version = 11 : i64} {
  func.func @_lambda_kernel(%arg0: i32, %arg1: memref<1x4x256xf32, #tpu.memory_space<vmem>>, %arg2: memref<256x64xf32, #tpu.memory_space<vmem>>, %arg3: memref<1x8x64xf32, #tpu.memory_space<vmem>>) attributes {dimension_semantics = [#tpu.dimension_semantics<parallel>], iteration_bounds = array<i64: 2>, scalar_prefetch = 0 : i64, scratch_operands = 0 : i64, tpu.core_type = #tpu.core_type<tc>, window_params = [{transform_indices = @transform_0, window_bounds = array<i64: 1, 4, 256>}, {pipeline_mode = #tpu.pipeline_mode<synchronous>, transform_indices = @transform_1, window_bounds = array<i64: 256, 64>}, {transform_indices = @transform_2, window_bounds = array<i64: 1, 8, 64>}]} {
    %c0 = arith.constant 0 : index
    %c0_0 = arith.constant 0 : index
    %c0_1 = arith.constant 0 : index
    %0 = vector.load %arg1[%c0, %c0_0, %c0_1] : memref<1x4x256xf32, #tpu.memory_space<vmem>>, vector<1x4x256xf32>
    %1 = vector.shape_cast %0 : vector<1x4x256xf32> to vector<4x256xf32>
    %c0_2 = arith.constant 0 : index
    %c0_3 = arith.constant 0 : index
    %2 = vector.load %arg2[%c0_2, %c0_3] : memref<256x64xf32, #tpu.memory_space<vmem>>, vector<256x64xf32>
    %cst = arith.constant dense<0.000000e+00> : vector<4x64xf32>
    %3 = tpu.matmul %1, %2, %cst {dimension_numbers = #tpu.dot_dimension_numbers<[1], [0], [0], [1], [0, 0, 1, 1], [], []>} : vector<4x256xf32>, vector<256x64xf32>, vector<4x64xf32> -> vector<4x64xf32>
    %4 = vector.shape_cast %3 : vector<4x64xf32> to vector<1x4x64xf32>
    %cst_4 = arith.constant 0.000000e+00 : f32
    %5 = vector.broadcast %cst_4 : f32 to vector<1x8x64xf32>
    %c0_5 = arith.constant 0 : index
    %c0_6 = arith.constant 0 : index
    %c0_7 = arith.constant 0 : index
    %6 = vector.load %arg3[%c0_5, %c0_6, %c0_7] : memref<1x8x64xf32, #tpu.memory_space<vmem>>, vector<1x8x64xf32>
    tpu.vector_store %arg3[%c0_5, %c0_6, %c0_7], %5 {strides = array<i32>} : memref<1x8x64xf32, #tpu.memory_space<vmem>>, vector<1x8x64xf32>,
    %c0_8 = arith.constant 0 : index
    %c2 = arith.constant 2 : index
    %c0_9 = arith.constant 0 : index
    %7 = vector.load %arg3[%c0_8, %c2, %c0_9] : memref<1x8x64xf32, #tpu.memory_space<vmem>>, vector<1x4x64xf32>
    tpu.vector_store %arg3[%c0_8, %c2, %c0_9], %4 {strides = array<i32>} : memref<1x8x64xf32, #tpu.memory_space<vmem>>, vector<1x4x64xf32>,
    return
  }
  func.func @transform_0(%arg0: i32) -> (i32, i32, i32) {
    %c0_i32 = arith.constant 0 : i32
    %c0_i32_0 = arith.constant 0 : i32
    %c0_i32_1 = arith.constant 0 : i32
    return %arg0, %c0_i32, %c0_i32_0 : i32, i32, i32
  }
  func.func @transform_1(%arg0: i32) -> (i32, i32) {
    %c0_i32 = arith.constant 0 : i32
    %c0_i32_0 = arith.constant 0 : i32
    %c0_i32_1 = arith.constant 0 : i32
    return %c0_i32, %c0_i32_0 : i32, i32
  }
  func.func @transform_2(%arg0: i32) -> (i32, i32, i32) {
    %c0_i32 = arith.constant 0 : i32
    %c0_i32_0 = arith.constant 0 : i32
    %c0_i32_1 = arith.constant 0 : i32
    return %arg0, %c0_i32, %c0_i32_0 : i32, i32, i32
  }
}

</mosaic_0001>

<llo_original>
// kernel: tpu_custom_call.1
$region0: #{tpu_custom_call.1}
  #allocation0 [shape = 'u32[]', space=smem, size = 0x4, offset = 0x4, fixed_abs, tag = 'smem constant byte address 0x4 - core index']
  #allocation1 [shape = 'u32[144,128]{1,0:T(1,128)}', space=vmem, size = 0x12000, scoped, tag = 'internal scratch']
  %s0 = inlined_call_operand.vmem [shape: f32[2,4,256], index: 0, kind: input, shape index: {}]
  %s1 = inlined_call_operand.vmem [shape: f32[256,64], index: 1, kind: input, shape index: {}]
  %s2 = inlined_call_operand.hbm [shape: f32[2,8,64], index: 2, kind: output, shape index: {}]
  %s3 = sld [smem:[#allocation0]]
  $region41: #{tpu_custom_call.1} parent=0
    _
  %s5 = ssub.s32 1, %s3
  %s6 = scalar_select 0, %s5, %s3
  $region1: #{tpu_custom_call.1} parent=0
    #allocation2 [shape = 'u8[8192]{0}', space=vmem, size = 0x2000, scoped, tag = 'output window, operand 0']
    #allocation3 [shape = 's32[2]{0}', space=sflag, size = 0x8, scoped, tag = 'scoped memory for tpu_custom_call.1']
    %7 = vsyncpa [#allocation3], 0
    %s8 = scalar_lea.sflag [#allocation3], 1
    %9 = vsyncpa %s8, 0
    loop: start=0, step=1, limit=4
    $region2: #{tpu_custom_call.1} parent=1 // loop_pre_header
      _
    $region3: #{tpu_custom_call.1} parent=1 // loop_header
      %s11 = sphi 0, %s15
      %p12 = scmp.ge.s32.totalorder %s11, 4
      %s21 = sphi 0, %s23
      %s24 = sphi 0, %s21
      %s25 = sphi 0, %s24
      %s41 = sphi 0, %s25
      %s45 = sphi 0, %s45
      %s47 = sphi 0, %s45
      %s48 = sphi 0, %s47
      %s62 = sphi 0, %s48
      %s68 = sphi 0, %s70
      %s71 = sphi 0, %s68
      %s72 = sphi 0, %s71
      %s88 = sphi 0, %s72
    $region4: #{tpu_custom_call.1} parent=1 // loop_header_branch
      %14 = sbr.rel (%p12) target = $region8
    $region5: #{tpu_custom_call.1} parent=1 // loop_body
      %s16 = ssub.s32 %s11, 1
      %s17 = ssub.s32 %s11, 2
      %s18 = sadd.s32 %s11, 1
      %s19 = ssub.s32 %s11, %s18
      %p20 = scmp.eq.s32.totalorder %s19, 0
      %s22 = sadd.s32 %s21, 1
      %s23 = scalar_select %p20, %s21, %s22
      %p26 = pneg %p20
      %p27 = scmp.eq.s32.totalorder %s11, 1
      %p28 = por %p26, %p27
      %p29 = scmp.ne.s32.totalorder %s21, %s24
      %p30 = scmp.eq.s32.totalorder %s11, 0
      %p31 = por %p29, %p30
      %p32 = scmp.ne.s32.totalorder %s21, %s24
      %p33 = scmp.eq.s32.totalorder %s16, 1
      %p34 = por %p32, %p33
      %p35 = scmp.ne.s32.totalorder %s24, %s25
      %p36 = scmp.eq.s32.totalorder %s16, 0
      %p37 = por %p35, %p36
      %p38 = scmp.ne.s32.totalorder %s24, %s25
      %p39 = scmp.eq.s32.totalorder %s17, 1
      %p40 = por %p38, %p39
      %p42 = scmp.ne.s32.totalorder %s25, %s41
      %p43 = scmp.eq.s32.totalorder %s17, 0
      %p44 = por %p42, %p43
      %s46 = sadd.s32 %s45, 1
      %p49 = scmp.eq.s32.totalorder %s11, 1
      %p50 = scmp.ne.s32.totalorder %s45, %s47
      %p51 = scmp.eq.s32.totalorder %s11, 0
      %p52 = por %p50, %p51
      %p53 = scmp.ne.s32.totalorder %s45, %s47
      %p54 = scmp.eq.s32.totalorder %s16, 1
      %p55 = por %p53, %p54
      %p56 = scmp.ne.s32.totalorder %s47, %s48
      %p57 = scmp.eq.s32.totalorder %s16, 0
      %p58 = por %p56, %p57
      %p59 = scmp.ne.s32.totalorder %s47, %s48
      %p60 = scmp.eq.s32.totalorder %s17, 1
      %p61 = por %p59, %p60
      %p63 = scmp.ne.s32.totalorder %s48, %s62
      %p64 = scmp.eq.s32.totalorder %s17, 0
      %p65 = por %p63, %p64
      %s66 = ssub.s32 %s11, %s18
      %p67 = scmp.eq.s32.totalorder %s66, 0
      %s69 = sadd.s32 %s68, 1
      %s70 = scalar_select %p67, %s68, %s69
      %p73 = pneg %p67
      %p74 = scmp.eq.s32.totalorder %s11, 1
      %p75 = por %p73, %p74
      %p76 = scmp.ne.s32.totalorder %s68, %s71
      %p77 = scmp.eq.s32.totalorder %s11, 0
      %p78 = por %p76, %p77
      %p79 = scmp.ne.s32.totalorder %s68, %s71
      %p80 = scmp.eq.s32.totalorder %s16, 1
      %p81 = por %p79, %p80
      %p82 = scmp.ne.s32.totalorder %s71, %s72
      %p83 = scmp.eq.s32.totalorder %s16, 0
      %p84 = por %p82, %p83
      %p85 = scmp.ne.s32.totalorder %s71, %s72
      %p86 = scmp.eq.s32.totalorder %s17, 1
      %p87 = por %p85, %p86
      %p89 = scmp.ne.s32.totalorder %s72, %s88
      %p90 = scmp.eq.s32.totalorder %s17, 0
      %p91 = por %p89, %p90
      %p92 = scmp.le.s32.totalorder 1, %s11
      %p93 = scmp.lt.s32.totalorder %s11, 3
      %p94 = pnand %p92, %p93
      %p95 = pneg %p94
      // Predicated region
      $region9: #{tpu_custom_call.1} parent=5 // pred_check
        _
      $region10: #{tpu_custom_call.1} parent=5 // pred_check_branch
        %97 = sbr.rel (%p94) target = $region12
      $region11: #{tpu_custom_call.1} parent=5 // pred_region
        %s98 = ssub.s32 %s11, 1
        // Predicated region
        $region13: #{tpu_custom_call.1} parent=11 // pred_check
          %p99 = pneg %p58
        $region14: #{tpu_custom_call.1} parent=11 // pred_check_branch
          %101 = sbr.rel (%p99) target = $region16
        $region15: #{tpu_custom_call.1} parent=11 // pred_region
          _
        $region16: #{tpu_custom_call.1} parent=11 // pred_fallthru
          _
      $region12: #{tpu_custom_call.1} parent=5 // pred_fallthru
        _
      %p102 = scmp.lt.s32.totalorder %s11, 2
      // Predicated region
      $region17: #{tpu_custom_call.1} parent=5 // pred_check
        %p103 = pneg %p102
      $region18: #{tpu_custom_call.1} parent=5 // pred_check_branch
        %105 = sbr.rel (%p103) target = $region20
      $region19: #{tpu_custom_call.1} parent=5 // pred_region
        // Predicated region
        $region21: #{tpu_custom_call.1} parent=19 // pred_check
          %p106 = pneg %p31
        $region22: #{tpu_custom_call.1} parent=19 // pred_check_branch
          %108 = sbr.rel (%p106) target = $region24
        $region23: #{tpu_custom_call.1} parent=19 // pred_region
          %p109 = scmp.lt.s32.totalorder %s11, 1
          %s110 = scalar_select %p109, %s11, 1
          %s111 = smul.addr %s110, 2
          %s112 = smul.addr %s111, 4
          %s113 = scalar_lea.vmem %s0, %s112
        $region24: #{tpu_custom_call.1} parent=19 // pred_fallthru
          _
      $region20: #{tpu_custom_call.1} parent=5 // pred_fallthru
        _
      %p114 = scmp.le.s32.totalorder 1, %s11
      %p115 = scmp.lt.s32.totalorder %s11, 3
      %p116 = pnand %p114, %p115
      %p117 = pneg %p116
      // Predicated region
      $region25: #{tpu_custom_call.1} parent=5 // pred_check
        _
      $region26: #{tpu_custom_call.1} parent=5 // pred_check_branch
        %119 = sbr.rel (%p116) target = $region28
      $region27: #{tpu_custom_call.1} parent=5 // pred_region
        %s120 = ssub.s32 %s11, 1
        %p121 = scmp.lt.s32.totalorder %s16, 1
        %s122 = scalar_select %p121, %s16, 1
        %s123 = smul.addr %s122, 2
        %s124 = smul.addr %s123, 4
        %s125 = scalar_lea.vmem %s0, %s124
        %p126 = pneg %p37
        %p127 = pneg %p34
        %p128 = pneg %p58
        %p129 = pneg %p55
        %p130 = pneg %p84
        %p131 = pneg %p81
        %s132 = sand.u32 %s71, 1
        %s133 = scalar_lea.sflag [#allocation3], %s132
        %s134 = sand.u32 %s71, 1
        %s135 = smul.addr %s134, 8
        %s136 = scalar_lea.vmem [#allocation2], %s135
        %p137 = scmp.lt.s32.totalorder %s16, 1
        %s138 = scalar_select %p137, %s16, 1
        %s139 = smul.addr %s138, 2
        %s140 = smul.addr %s139, 4
        %s141 = scalar_lea.vmem %s0, %s140
        %v142 = vld [vmem:[%s141] sm:$0xff]
        %v143 = vld [vmem:[%s1] sm:$0xff]
        %v144 = vld [vmem:[%s1 + $0x8] sm:$0xff]
        %v145 = vld [vmem:[%s1 + $0x10] sm:$0xff]
        %v146 = vld [vmem:[%s1 + $0x18] sm:$0xff]
        %v147 = vld [vmem:[%s1 + $0x20] sm:$0xff]
        %v148 = vld [vmem:[%s1 + $0x28] sm:$0xff]
        %v149 = vld [vmem:[%s1 + $0x30] sm:$0xff]
        %v150 = vld [vmem:[%s1 + $0x38] sm:$0xff]
        %v151 = vld [vmem:[%s1 + $0x40] sm:$0xff]
        %v152 = vld [vmem:[%s1 + $0x48] sm:$0xff]
        %v153 = vld [vmem:[%s1 + $0x50] sm:$0xff]
        %v154 = vld [vmem:[%s1 + $0x58] sm:$0xff]
        %v155 = vld [vmem:[%s1 + $0x60] sm:$0xff]
        %v156 = vld [vmem:[%s1 + $0x68] sm:$0xff]
        %v157 = vld [vmem:[%s1 + $0x70] sm:$0xff]
        %v158 = vld [vmem:[%s1 + $0x78] sm:$0xff]
        %v159 = vld [vmem:[%s1 + $0x80] sm:$0xff]
        %v160 = vld [vmem:[%s1 + $0x88] sm:$0xff]
        %v161 = vld [vmem:[%s1 + $0x90] sm:$0xff]
        %v162 = vld [vmem:[%s1 + $0x98] sm:$0xff]
        %v163 = vld [vmem:[%s1 + $0xa0] sm:$0xff]
        %v164 = vld [vmem:[%s1 + $0xa8] sm:$0xff]
        %v165 = vld [vmem:[%s1 + $0xb0] sm:$0xff]
        %v166 = vld [vmem:[%s1 + $0xb8] sm:$0xff]
        %v167 = vld [vmem:[%s1 + $0xc0] sm:$0xff]
        %v168 = vld [vmem:[%s1 + $0xc8] sm:$0xff]
        %v169 = vld [vmem:[%s1 + $0xd0] sm:$0xff]
        %v170 = vld [vmem:[%s1 + $0xd8] sm:$0xff]
        %v171 = vld [vmem:[%s1 + $0xe0] sm:$0xff]
        %v172 = vld [vmem:[%s1 + $0xe8] sm:$0xff]
        %v173 = vld [vmem:[%s1 + $0xf0] sm:$0xff]
        %v174 = vld [vmem:[%s1 + $0xf8] sm:$0xff]
        %v176 = vcombine.high %v142, %v142
        %178 = vmatprep.subr.mxu0 0.0
        %179 = vmatpush1.msra.mxu0 %v158
        %180 = vmatprep.subr.mxu0 0.0
        %181 = vmatpush1.msra.mxu0 %v157
        %182 = vmatprep.subr.mxu0 0.0
        %183 = vmatpush1.msra.mxu0 %v156
        %184 = vmatprep.subr.mxu0 0.0
        %185 = vmatpush1.msra.mxu0 %v155
        %186 = vmatprep.subr.mxu0 0.0
        %187 = vmatpush1.msra.mxu0 %v154
        %188 = vmatprep.subr.mxu0 0.0
        %189 = vmatpush1.msra.mxu0 %v153
        %190 = vmatprep.subr.mxu0 0.0
        %191 = vmatpush1.msra.mxu0 %v152
        %192 = vmatprep.subr.mxu0 0.0
        %193 = vmatpush1.msra.mxu0 %v151
        %194 = vmatprep.subr.mxu0 0.0
        %195 = vmatpush1.msra.mxu0 %v150
        %196 = vmatprep.subr.mxu0 0.0
        %197 = vmatpush1.msra.mxu0 %v149
        %198 = vmatprep.subr.mxu0 0.0
        %199 = vmatpush1.msra.mxu0 %v148
        %200 = vmatprep.subr.mxu0 0.0
        %201 = vmatpush1.msra.mxu0 %v147
        %202 = vmatprep.subr.mxu0 0.0
        %203 = vmatpush1.msra.mxu0 %v146
        %204 = vmatprep.subr.mxu0 0.0
        %205 = vmatpush1.msra.mxu0 %v145
        %206 = vmatprep.subr.mxu0 0.0
        %207 = vmatpush1.msra.mxu0 %v144
        %208 = vmatprep.subr.mxu0 0.0
        %209 = vmatpush1.msra.mxu0 %v143
        %210 = vmatprep.subr.mxu0 0.0
        %211 = vmatpush2.msra.mxu0 %v174
        %212 = vmatprep.subr.mxu0 0.0
        %213 = vmatpush2.msra.mxu0 %v173
        %214 = vmatprep.subr.mxu0 0.0
        %215 = vmatpush2.msra.mxu0 %v172
        %216 = vmatprep.subr.mxu0 0.0
        %217 = vmatpush2.msra.mxu0 %v171
        %218 = vmatprep.subr.mxu0 0.0
        %219 = vmatpush2.msra.mxu0 %v170
        %220 = vmatprep.subr.mxu0 0.0
        %221 = vmatpush2.msra.mxu0 %v169
        %222 = vmatprep.subr.mxu0 0.0
        %223 = vmatpush2.msra.mxu0 %v168
        %224 = vmatprep.subr.mxu0 0.0
        %225 = vmatpush2.msra.mxu0 %v167
        %226 = vmatprep.subr.mxu0 0.0
        %227 = vmatpush2.msra.mxu0 %v166
        %228 = vmatprep.subr.mxu0 0.0
        %229 = vmatpush2.msra.mxu0 %v165
        %230 = vmatprep.subr.mxu0 0.0
        %231 = vmatpush2.msra.mxu0 %v164
        %232 = vmatprep.subr.mxu0 0.0
        %233 = vmatpush2.msra.mxu0 %v163
        %234 = vmatprep.subr.mxu0 0.0
        %235 = vmatpush2.msra.mxu0 %v162
        %236 = vmatprep.subr.mxu0 0.0
        %237 = vmatpush2.msra.mxu0 %v161
        %238 = vmatprep.subr.mxu0 0.0
        %239 = vmatpush2.msra.mxu0 %v160
        %240 = vmatprep.subr.mxu0 0.0
        %241 = vmatpush2.msra.mxu0 %v159
        %242 = vmatprep.mubr.f32.mxu0 %v176
        %243 = vmatmul.mubr.f32.gmra.mxu0 %v142
        %v244 = vpop.f32.mrf.mxu0
        %v245 = vadd.f32 0.0, %v244
        %v246 = vpop.f32.mrf.mxu0
        %247 = vdwg.mxu0
        %vm248 = vcmask 523264
        %249 = vst.msk [vmem:[%s136] sm:$0xff] %vm248, 0.0
        %vm250 = vcmask 519168
        %251 = vst.msk [vmem:[%s136 + $0x2] sm:$0xf] %vm250, %v245
        %s252 = sand.u32 %s71, 1
        %s253 = scalar_lea.sflag [#allocation3], %s252
        %s254 = sand.u32 %s71, 1
        %s255 = smul.addr %s254, 8
        %s256 = scalar_lea.vmem [#allocation2], %s255
        // Predicated region
        $region29: #{tpu_custom_call.1} parent=27 // pred_check
          %p257 = pneg %p81
        $region30: #{tpu_custom_call.1} parent=27 // pred_check_branch
          %259 = sbr.rel (%p257) target = $region32
        $region31: #{tpu_custom_call.1} parent=27 // pred_region
          %s261 = ssub.s32 128, 128
          %262 = vsyncadd %s253, %s261
          %s263 = smul.addr %s16, 128
          %s264 = scalar_lea.hbm %s2, %s263
          %s266 = sshll.u32 %s256, 4
          %s267 = int_to_ptr.vmem [resolvable:$true] %s266
          %269 = dma.vmem_to_hbm [thread:$0]  %s267, 128, %s264, %s253
        $region32: #{tpu_custom_call.1} parent=27 // pred_fallthru
          _
      $region28: #{tpu_custom_call.1} parent=5 // pred_fallthru
        _
      %p270 = scmp.le.s32.totalorder 2, %s11
      // Predicated region
      $region33: #{tpu_custom_call.1} parent=5 // pred_check
        %p271 = pneg %p270
      $region34: #{tpu_custom_call.1} parent=5 // pred_check_branch
        %273 = sbr.rel (%p271) target = $region36
      $region35: #{tpu_custom_call.1} parent=5 // pred_region
        %s274 = ssub.s32 %s11, 2
        // Predicated region
        $region37: #{tpu_custom_call.1} parent=35 // pred_check
          %p275 = pneg %p87
        $region38: #{tpu_custom_call.1} parent=35 // pred_check_branch
          %277 = sbr.rel (%p275) target = $region40
        $region39: #{tpu_custom_call.1} parent=35 // pred_region
          %s278 = sand.u32 %s72, 1
          %s279 = scalar_lea.sflag [#allocation3], %s278
          %s280 = sand.u32 %s72, 1
          %s281 = smul.addr %s280, 8
          %s282 = scalar_lea.vmem [#allocation2], %s281
          %283 = dma.done %s279, 128
        $region40: #{tpu_custom_call.1} parent=35 // pred_fallthru
          _
      $region36: #{tpu_custom_call.1} parent=5 // pred_fallthru
        _
    $region6: #{tpu_custom_call.1} parent=1 // loop_footer
      %s15 = sadd.s32 1, %s11
    $region7: #{tpu_custom_call.1} parent=1 // loop_footer_branch
      %10 = sbr.rel target = $region3
    $region8: #{tpu_custom_call.1} parent=1 // loop_exit
      _
    %284 = vsyncpa [#allocation3], 1
    %s285 = scalar_lea.sflag [#allocation3], 1
    %286 = vsyncpa %s285, 1

</llo_original>
